<compile_context>
chip_gen: v6e
topology: v6e:2x2x1
jax: 0.10.0
libtpu: 0.0.40
codegen_flags: <defaults>
</compile_context>

<pallas_src>
import jax
import jax.numpy as jnp
from jax.experimental import pallas as pl
from jax.experimental.pallas import tpu as pltpu

_LANE = 128      # vreg lane width (last dim)
_SUBLANE = 8     # f32 vreg sublane count (second-to-last dim)


def _round_up(x, m):
    return (x + m - 1) // m * m


def dqn_kernel(x_ref, w1_ref, b1_ref, w2_ref, b2_ref, w3_ref, b3_ref, o_ref):
    # Fully fused forward for one batch tile: 3 MXU matmuls + VPU bias/ReLU.
    # Matmuls accumulate in f32; bias add + ReLU stay f32 (VPU-friendly on all
    # chips).  Activations are cast to the weight dtype right before each dot,
    # so bf16 weights give bf16 MXU operands with no wrapper-side cast of x.
    x = x_ref[...].astype(w1_ref.dtype)
    h1 = jnp.dot(x, w1_ref[...], preferred_element_type=jnp.float32) + b1_ref[...]
    h1 = jnp.maximum(h1, 0.0)
    h2 = jnp.dot(h1.astype(w2_ref.dtype), w2_ref[...],
                 preferred_element_type=jnp.float32) + b2_ref[...]
    h2 = jnp.maximum(h2, 0.0)
    out = jnp.dot(h2.astype(w3_ref.dtype), w3_ref[...],
                  preferred_element_type=jnp.float32) + b3_ref[...]
    o_ref[...] = out.astype(o_ref.dtype)


def prepare_dqn_params(w1, b1, w2, b2, w3, b3, *, compute_dtype=None):
    """One-time parameter prep (call once, reuse across forward calls).

    Pads the hidden dim to a lane multiple (no-op for hidden=128), reshapes
    biases to (1, out), and optionally casts weights to `compute_dtype`
    (e.g. jnp.bfloat16 -- valid on v5e/v6e/v7x; halves weight DMA traffic).
    Biases stay f32 (added to the f32 MXU accumulator).  Zero padding of the
    hidden dim preserves the math exactly (ReLU(0)=0, zero rows contribute 0).
    """
    n_obs, hidden = w1.shape
    n_actions = w3.shape[1]
    hid_p = _round_up(hidden, _LANE)
    wd = jnp.float32 if compute_dtype is None else compute_dtype

    def pad_w(w, rows, cols):
        return jnp.pad(w, ((0, rows - w.shape[0]), (0, cols - w.shape[1]))).astype(wd)

    def pad_b(b, cols):
        b = b.reshape(1, -1)
        return jnp.pad(b, ((0, 0), (0, cols - b.shape[1]))).astype(jnp.float32)

    return (pad_w(w1, n_obs, hid_p), pad_b(b1, hid_p),
            pad_w(w2, hid_p, hid_p), pad_b(b2, hid_p),
            pad_w(w3, hid_p, n_actions), pad_b(b3, n_actions))


def dqn_forward(x, w1, b1, w2, b2, w3, b3, *, block_batch=4096):
    """Fused DQN forward pass.

    x:  (batch, n_observations) float32 (kept f32 in HBM; cast in-kernel).
    w*/b*: params from prepare_dqn_params() -- hidden dim lane-padded,
           weights optionally bf16, biases f32 of shape (1, out).
    block_batch: max batch rows per grid step (weights stay VMEM-resident).
    """
    batch, n_obs = x.shape
    assert n_obs == w1.shape[0], "x feature dim must match prepared w1"
    hid_p = w1.shape[1]
    n_actions = w3.shape[1]

    w_itemsize = jnp.dtype(w1.dtype).itemsize
    x_itemsize = jnp.dtype(x.dtype).itemsize
    # Sublane multiple for the batch tile: 8 for f32, 16 for bf16, 32 for 8-bit.
    sub = _SUBLANE * max(1, 4 // w_itemsize)

    # Batch tile: big enough to amortize ~0.35us/step overhead, but split into
    # >=2 steps for non-tiny batches so "parallel" can use both TCs on v7x.
    tb_cap = max(1, min(block_batch, batch))
    if batch >= 4 * sub:
        tb_cap = min(tb_cap, (batch + 1) // 2)
    tb = _round_up(tb_cap, sub)
    batch_p = _round_up(batch, tb)
    grid = (batch_p // tb,)

    # Only the batch dim is ever padded (rows of zeros -> bias-only outputs,
    # sliced off below).  No lane padding of x or the output.
    x_p = x if batch_p == batch else jnp.pad(x, ((0, batch_p - batch), (0, 0)))

    # x / out tile over the batch grid; weights & biases map every grid step
    # to block (0, 0) so they are DMA'd once and stay resident in VMEM.
    in_specs = [
        pl.BlockSpec((tb, n_obs), lambda i: (i, 0)),        # x tile (unpadded lanes)
        pl.BlockSpec((n_obs, hid_p), lambda i: (0, 0)),     # w1 (resident)
        pl.BlockSpec((1, hid_p), lambda i: (0, 0)),         # b1
        pl.BlockSpec((hid_p, hid_p), lambda i: (0, 0)),     # w2
        pl.BlockSpec((1, hid_p), lambda i: (0, 0)),         # b2
        pl.BlockSpec((hid_p, n_actions), lambda i: (0, 0)), # w3
        pl.BlockSpec((1, n_actions), lambda i: (0, 0)),     # b3
    ]
    out_specs = pl.BlockSpec((tb, n_actions), lambda i: (i, 0))

    # Honest VMEM budget: double-buffered x/out tiles and (small) weights,
    # plus in-kernel f32 intermediates (h1, h2) and one cast temp.
    weight_bytes = sum(int(a.size) * jnp.dtype(a.dtype).itemsize
                       for a in (w1, b1, w2, b2, w3, b3))
    tile_bytes = tb * n_obs * x_itemsize + tb * n_actions * 4
    scratch_bytes = 2 * tb * hid_p * 4 + tb * hid_p * w_itemsize
    est = 2 * (tile_bytes + weight_bytes) + scratch_bytes + (2 << 20)
    vmem_limit = int(min(max(est, 16 << 20), 56 << 20))

    out_p = pl.pallas_call(
        dqn_kernel,
        out_shape=jax.ShapeDtypeStruct((batch_p, n_actions), jnp.float32),
        grid=grid,
        in_specs=in_specs,
        out_specs=out_specs,
        compiler_params=pltpu.CompilerParams(
            dimension_semantics=("parallel",),
            vmem_limit_bytes=vmem_limit,
        ),
    )(x_p, w1, b1, w2, b2, w3, b3)

    # Only the batch padding (if any) needs slicing off.
    return out_p if batch_p == batch else out_p[:batch]


def init_dqn_params(key, n_observations, n_actions, hidden_size=128):
    """PyTorch-style uniform fan-in init, stored as (in, out)."""
    ks = jax.random.split(key, 6)

    def linear(kw, kb, fan_in, fan_out):
        bound = 1.0 / jnp.sqrt(jnp.float32(fan_in))
        w = jax.random.uniform(kw, (fan_in, fan_out), jnp.float32, -bound, bound)
        b = jax.random.uniform(kb, (1, fan_out), jnp.float32, -bound, bound)
        return w, b

    w1, b1 = linear(ks[0], ks[1], n_observations, hidden_size)
    w2, b2 = linear(ks[2], ks[3], hidden_size, hidden_size)
    w3, b3 = linear(ks[4], ks[5], hidden_size, n_actions)
    return w1, b1, w2, b2, w3, b3


def _reference(x, w1, b1, w2, b2, w3, b3):
    h1 = jnp.maximum(x @ w1 + b1, 0.0)
    h2 = jnp.maximum(h1 @ w2 + b2, 0.0)
    return h2 @ w3 + b3


if __name__ == "__main__":
    # Small shapes consistent with a DQN on a gym-style env; hidden_size=128
    # matches the PyTorch module default (already MXU/lane aligned).
    n_observations = 8
    n_actions = 4
    hidden_size = 128

    key = jax.random.PRNGKey(0)
    k_x1, k_x2, k_p = jax.random.split(key, 3)
    raw_params = init_dqn_params(k_p, n_observations, n_actions, hidden_size)
    # One-time prep (padding/cast hoisted out of the per-call path).  For bf16
    # HBM-traffic savings on any chip, pass compute_dtype=jnp.bfloat16 here
    # (then compare with a looser ~1e-2 tolerance).
    params = prepare_dqn_params(*raw_params)

    # Case 1: tiny inference batch -> single fused grid step.
    x_small = jax.random.normal(k_x1, (4, n_observations), dtype=jnp.float32)
    out_small = dqn_forward(x_small, *params)
    jax.block_until_ready(out_small)
    assert out_small.shape == (4, n_actions)
    assert jnp.allclose(out_small, _reference(x_small, *raw_params),
                        atol=1e-5, rtol=1e-5)

    # Case 2: replay-style ragged batch -> multi-step batch grid with
    # VMEM-resident weights (block_batch kept tiny here just to exercise the
    # tiled path; real training batches use the 4096 default / >=2-step split).
    x_batch = jax.random.normal(k_x2, (20, n_observations), dtype=jnp.float32)
    out_batch = dqn_forward(x_batch, *params, block_batch=8)
    jax.block_until_ready(out_batch)
    assert out_batch.shape == (20, n_actions)
    assert jnp.allclose(out_batch, _reference(x_batch, *raw_params),
                        atol=1e-5, rtol=1e-5)

    print("KERNEL_OK")
</pallas_src>

<mosaic_0001>
module attributes {stable_mosaic.version = 11 : i64} {
  func.func @dqn_kernel(%arg0: i32, %arg1: memref<8x8xf32, #tpu.memory_space<vmem>>, %arg2: memref<8x128xf32, #tpu.memory_space<vmem>>, %arg3: memref<1x128xf32, #tpu.memory_space<vmem>>, %arg4: memref<128x128xf32, #tpu.memory_space<vmem>>, %arg5: memref<1x128xf32, #tpu.memory_space<vmem>>, %arg6: memref<128x4xf32, #tpu.memory_space<vmem>>, %arg7: memref<1x4xf32, #tpu.memory_space<vmem>>, %arg8: memref<8x4xf32, #tpu.memory_space<vmem>>) attributes {dimension_semantics = [#tpu.dimension_semantics<parallel>], iteration_bounds = array<i64: 1>, scalar_prefetch = 0 : i64, scratch_operands = 0 : i64, tpu.core_type = #tpu.core_type<tc>, window_params = [{transform_indices = @transform_0, window_bounds = array<i64: 8, 8>}, {pipeline_mode = #tpu.pipeline_mode<synchronous>, transform_indices = @transform_1, window_bounds = array<i64: 8, 128>}, {pipeline_mode = #tpu.pipeline_mode<synchronous>, transform_indices = @transform_2, window_bounds = array<i64: 1, 128>}, {pipeline_mode = #tpu.pipeline_mode<synchronous>, transform_indices = @transform_3, window_bounds = array<i64: 128, 128>}, {pipeline_mode = #tpu.pipeline_mode<synchronous>, transform_indices = @transform_4, window_bounds = array<i64: 1, 128>}, {pipeline_mode = #tpu.pipeline_mode<synchronous>, transform_indices = @transform_5, window_bounds = array<i64: 128, 4>}, {pipeline_mode = #tpu.pipeline_mode<synchronous>, transform_indices = @transform_6, window_bounds = array<i64: 1, 4>}, {transform_indices = @transform_7, window_bounds = array<i64: 8, 4>}]} {
    %c0 = arith.constant 0 : index
    %c0_0 = arith.constant 0 : index
    %0 = vector.load %arg1[%c0, %c0_0] : memref<8x8xf32, #tpu.memory_space<vmem>>, vector<8x8xf32>
    %c0_1 = arith.constant 0 : index
    %c0_2 = arith.constant 0 : index
    %1 = vector.load %arg2[%c0_1, %c0_2] : memref<8x128xf32, #tpu.memory_space<vmem>>, vector<8x128xf32>
    %cst = arith.constant dense<0.000000e+00> : vector<8x128xf32>
    %2 = tpu.matmul %0, %1, %cst {dimension_numbers = #tpu.dot_dimension_numbers<[1], [0], [0], [1], [0, 0, 1, 1], [], []>} : vector<8x8xf32>, vector<8x128xf32>, vector<8x128xf32> -> vector<8x128xf32>
    %c0_3 = arith.constant 0 : index
    %c0_4 = arith.constant 0 : index
    %3 = vector.load %arg3[%c0_3, %c0_4] : memref<1x128xf32, #tpu.memory_space<vmem>>, vector<1x128xf32>
    %4 = vector.broadcast %3 : vector<1x128xf32> to vector<8x128xf32>
    %5 = arith.addf %2, %4 : vector<8x128xf32>
    %cst_5 = arith.constant 0.000000e+00 : f32
    %6 = vector.broadcast %cst_5 : f32 to vector<8x128xf32>
    %7 = arith.maximumf %5, %6 : vector<8x128xf32>
    %c0_6 = arith.constant 0 : index
    %c0_7 = arith.constant 0 : index
    %8 = vector.load %arg4[%c0_6, %c0_7] : memref<128x128xf32, #tpu.memory_space<vmem>>, vector<128x128xf32>
    %cst_8 = arith.constant dense<0.000000e+00> : vector<8x128xf32>
    %9 = tpu.matmul %7, %8, %cst_8 {dimension_numbers = #tpu.dot_dimension_numbers<[1], [0], [0], [1], [0, 0, 1, 1], [], []>} : vector<8x128xf32>, vector<128x128xf32>, vector<8x128xf32> -> vector<8x128xf32>
    %c0_9 = arith.constant 0 : index
    %c0_10 = arith.constant 0 : index
    %10 = vector.load %arg5[%c0_9, %c0_10] : memref<1x128xf32, #tpu.memory_space<vmem>>, vector<1x128xf32>
    %11 = vector.broadcast %10 : vector<1x128xf32> to vector<8x128xf32>
    %12 = arith.addf %9, %11 : vector<8x128xf32>
    %cst_11 = arith.constant 0.000000e+00 : f32
    %13 = vector.broadcast %cst_11 : f32 to vector<8x128xf32>
    %14 = arith.maximumf %12, %13 : vector<8x128xf32>
    %c0_12 = arith.constant 0 : index
    %c0_13 = arith.constant 0 : index
    %15 = vector.load %arg6[%c0_12, %c0_13] : memref<128x4xf32, #tpu.memory_space<vmem>>, vector<128x4xf32>
    %cst_14 = arith.constant dense<0.000000e+00> : vector<8x4xf32>
    %16 = tpu.matmul %14, %15, %cst_14 {dimension_numbers = #tpu.dot_dimension_numbers<[1], [0], [0], [1], [0, 0, 1, 1], [], []>} : vector<8x128xf32>, vector<128x4xf32>, vector<8x4xf32> -> vector<8x4xf32>
    %c0_15 = arith.constant 0 : index
    %c0_16 = arith.constant 0 : index
    %17 = vector.load %arg7[%c0_15, %c0_16] : memref<1x4xf32, #tpu.memory_space<vmem>>, vector<1x4xf32>
    %18 = vector.broadcast %17 : vector<1x4xf32> to vector<8x4xf32>
    %19 = arith.addf %16, %18 : vector<8x4xf32>
    %c0_17 = arith.constant 0 : index
    %c0_18 = arith.constant 0 : index
    %20 = vector.load %arg8[%c0_17, %c0_18] : memref<8x4xf32, #tpu.memory_space<vmem>>, vector<8x4xf32>
    tpu.vector_store %arg8[%c0_17, %c0_18], %19 {strides = array<i32>} : memref<8x4xf32, #tpu.memory_space<vmem>>, vector<8x4xf32>,
    return
  }
  func.func @transform_0(%arg0: i32) -> (i32, i32) {
    %c0_i32 = arith.constant 0 : i32
    %c0_i32_0 = arith.constant 0 : i32
    return %arg0, %c0_i32 : i32, i32
  }
  func.func @transform_1(%arg0: i32) -> (i32, i32) {
    %c0_i32 = arith.constant 0 : i32
    %c0_i32_0 = arith.constant 0 : i32
    %c0_i32_1 = arith.constant 0 : i32
    return %c0_i32, %c0_i32_0 : i32, i32
  }
  func.func @transform_2(%arg0: i32) -> (i32, i32) {
    %c0_i32 = arith.constant 0 : i32
    %c0_i32_0 = arith.constant 0 : i32
    %c0_i32_1 = arith.constant 0 : i32
    return %c0_i32, %c0_i32_0 : i32, i32
  }
  func.func @transform_3(%arg0: i32) -> (i32, i32) {
    %c0_i32 = arith.constant 0 : i32
    %c0_i32_0 = arith.constant 0 : i32
    %c0_i32_1 = arith.constant 0 : i32
    return %c0_i32, %c0_i32_0 : i32, i32
  }
  func.func @transform_4(%arg0: i32) -> (i32, i32) {
    %c0_i32 = arith.constant 0 : i32
    %c0_i32_0 = arith.constant 0 : i32
    %c0_i32_1 = arith.constant 0 : i32
    return %c0_i32, %c0_i32_0 : i32, i32
  }
  func.func @transform_5(%arg0: i32) -> (i32, i32) {
    %c0_i32 = arith.constant 0 : i32
    %c0_i32_0 = arith.constant 0 : i32
    %c0_i32_1 = arith.constant 0 : i32
    return %c0_i32, %c0_i32_0 : i32, i32
  }
  func.func @transform_6(%arg0: i32) -> (i32, i32) {
    %c0_i32 = arith.constant 0 : i32
    %c0_i32_0 = arith.constant 0 : i32
    %c0_i32_1 = arith.constant 0 : i32
    return %c0_i32, %c0_i32_0 : i32, i32
  }
  func.func @transform_7(%arg0: i32) -> (i32, i32) {
    %c0_i32 = arith.constant 0 : i32
    %c0_i32_0 = arith.constant 0 : i32
    return %arg0, %c0_i32 : i32, i32
  }
}

</mosaic_0001>

<llo_original>
// kernel: tpu_custom_call.1
$region0: #{tpu_custom_call.1}
  #allocation0 [shape = 'u32[]', space=smem, size = 0x4, offset = 0x4, fixed_abs, tag = 'smem constant byte address 0x4 - core index']
  #allocation1 [shape = 'u32[144,128]{1,0:T(1,128)}', space=vmem, size = 0x12000, scoped, tag = 'internal scratch']
  %s0 = inlined_call_operand.vmem [shape: f32[8,8], index: 0, kind: input, shape index: {}]
  %s1 = inlined_call_operand.hbm [shape: f32[8,128], index: 1, kind: input, shape index: {}]
  %s2 = inlined_call_operand.vmem [shape: f32[1,128], index: 2, kind: input, shape index: {}]
  %s3 = inlined_call_operand.vmem [shape: f32[128,128], index: 3, kind: input, shape index: {}]
  %s4 = inlined_call_operand.hbm [shape: f32[1,128], index: 4, kind: input, shape index: {}]
  %s5 = inlined_call_operand.vmem [shape: f32[128,4], index: 5, kind: input, shape index: {}]
  %s6 = inlined_call_operand.vmem [shape: f32[1,4], index: 6, kind: input, shape index: {}]
  %s7 = inlined_call_operand.vmem [shape: f32[8,4], index: 7, kind: output, shape index: {}]
  %s8 = sld [smem:[#allocation0]]
  $region46: #{tpu_custom_call.1} parent=0
    _
  %s10 = ssub.s32 1, %s8
  %s11 = scalar_select 0, %s10, %s8
  $region1: #{tpu_custom_call.1} parent=0
    #allocation2 [shape = 'u8[4096]{0}', space=vmem, size = 0x1000, scoped, tag = 'input window, operand 1, single buffered']
    #allocation3 [shape = 's32[1]{0}', space=sflag, size = 0x4, scoped, tag = 'scoped memory for tpu_custom_call.1']
    #allocation4 [shape = 'u8[512]{0}', space=vmem, size = 0x400, scoped, tag = 'input window, operand 4, single buffered']
    #allocation5 [shape = 's32[1]{0}', space=sflag, size = 0x4, scoped, tag = 'scoped memory for tpu_custom_call.1']
    %12 = vsyncpa [#allocation3], 0
    %13 = vsyncpa [#allocation5], 0
    // Predicated region
    $region2: #{tpu_custom_call.1} parent=1 // pred_check
      _
    $region3: #{tpu_custom_call.1} parent=1 // pred_check_branch
      %15 = sbr.rel (0) target = $region5
    $region4: #{tpu_custom_call.1} parent=1 // pred_region
      _
    $region5: #{tpu_custom_call.1} parent=1 // pred_fallthru
      _
    // Predicated region
    $region6: #{tpu_custom_call.1} parent=1 // pred_check
      _
    $region7: #{tpu_custom_call.1} parent=1 // pred_check_branch
      %17 = sbr.rel (0) target = $region9
    $region8: #{tpu_custom_call.1} parent=1 // pred_region
      %s19 = ssub.s32 128, 128
      %20 = vsyncadd [#allocation3], %s19
      %s22 = sshll.u32 [#allocation2], 4
      %s23 = int_to_ptr.vmem [resolvable:$true] %s22
      %25 = dma.hbm_to_vmem [thread:$0]  %s1, 128, %s23, [#allocation3]
    $region9: #{tpu_custom_call.1} parent=1 // pred_fallthru
      _
    // Predicated region
    $region10: #{tpu_custom_call.1} parent=1 // pred_check
      _
    $region11: #{tpu_custom_call.1} parent=1 // pred_check_branch
      %27 = sbr.rel (0) target = $region13
    $region12: #{tpu_custom_call.1} parent=1 // pred_region
      _
    $region13: #{tpu_custom_call.1} parent=1 // pred_fallthru
      _
    // Predicated region
    $region14: #{tpu_custom_call.1} parent=1 // pred_check
      _
    $region15: #{tpu_custom_call.1} parent=1 // pred_check_branch
      %29 = sbr.rel (0) target = $region17
    $region16: #{tpu_custom_call.1} parent=1 // pred_region
      _
    $region17: #{tpu_custom_call.1} parent=1 // pred_fallthru
      _
    // Predicated region
    $region18: #{tpu_custom_call.1} parent=1 // pred_check
      _
    $region19: #{tpu_custom_call.1} parent=1 // pred_check_branch
      %31 = sbr.rel (0) target = $region21
    $region20: #{tpu_custom_call.1} parent=1 // pred_region
      %s33 = ssub.s32 16, 16
      %34 = vsyncadd [#allocation5], %s33
      %s36 = sshll.u32 [#allocation4], 4
      %s37 = int_to_ptr.vmem [resolvable:$true] %s36
      %39 = dma.hbm_to_vmem [thread:$0]  %s4, 16, %s37, [#allocation5]
    $region21: #{tpu_custom_call.1} parent=1 // pred_fallthru
      _
    // Predicated region
    $region22: #{tpu_custom_call.1} parent=1 // pred_check
      _
    $region23: #{tpu_custom_call.1} parent=1 // pred_check_branch
      %41 = sbr.rel (0) target = $region25
    $region24: #{tpu_custom_call.1} parent=1 // pred_region
      _
    $region25: #{tpu_custom_call.1} parent=1 // pred_fallthru
      _
    // Predicated region
    $region26: #{tpu_custom_call.1} parent=1 // pred_check
      _
    $region27: #{tpu_custom_call.1} parent=1 // pred_check_branch
      %43 = sbr.rel (0) target = $region29
    $region28: #{tpu_custom_call.1} parent=1 // pred_region
      _
    $region29: #{tpu_custom_call.1} parent=1 // pred_fallthru
      _
    // Predicated region
    $region30: #{tpu_custom_call.1} parent=1 // pred_check
      _
    $region31: #{tpu_custom_call.1} parent=1 // pred_check_branch
      %45 = sbr.rel (0) target = $region33
    $region32: #{tpu_custom_call.1} parent=1 // pred_region
      %46 = dma.done [#allocation3], 128
    $region33: #{tpu_custom_call.1} parent=1 // pred_fallthru
      _
    // Predicated region
    $region34: #{tpu_custom_call.1} parent=1 // pred_check
      _
    $region35: #{tpu_custom_call.1} parent=1 // pred_check_branch
      %48 = sbr.rel (0) target = $region37
    $region36: #{tpu_custom_call.1} parent=1 // pred_region
      %49 = dma.done [#allocation5], 16
    $region37: #{tpu_custom_call.1} parent=1 // pred_fallthru
      _
    %v50 = vld [vmem:[%s0] sm:$0xff]
    %v51 = vld [vmem:[#allocation2] sm:$0xff]
    %v52 = vld [vmem:[%s2] sm:$0x1]
    %v54 = vlaneseq
    %v55 = vshrl.u32 %v54, 7
    %v56 = vsub.s32 0, %v55
    %v57 = vrot.slane %v52, %v56
    %vm59 = vcmask 64512
    %v61 = vsel %vm59, %v50, 0
    %63 = vmatprep.subr.mxu0 0.0
    %64 = vmatpush1.msra.mxu0 0.0
    %65 = vmatprep.subr.mxu0 0.0
    %66 = vmatpush1.msra.mxu0 0.0
    %67 = vmatprep.subr.mxu0 0.0
    %68 = vmatpush1.msra.mxu0 0.0
    %69 = vmatprep.subr.mxu0 0.0
    %70 = vmatpush1.msra.mxu0 0.0
    %71 = vmatprep.subr.mxu0 0.0
    %72 = vmatpush1.msra.mxu0 0.0
    %73 = vmatprep.subr.mxu0 0.0
    %74 = vmatpush1.msra.mxu0 0.0
    %75 = vmatprep.subr.mxu0 0.0
    %76 = vmatpush1.msra.mxu0 0.0
    %77 = vmatprep.subr.mxu0 0.0
    %78 = vmatpush1.msra.mxu0 0.0
    %79 = vmatprep.subr.mxu0 0.0
    %80 = vmatpush1.msra.mxu0 0.0
    %81 = vmatprep.subr.mxu0 0.0
    %82 = vmatpush1.msra.mxu0 0.0
    %83 = vmatprep.subr.mxu0 0.0
    %84 = vmatpush1.msra.mxu0 0.0
    %85 = vmatprep.subr.mxu0 0.0
    %86 = vmatpush1.msra.mxu0 0.0
    %87 = vmatprep.subr.mxu0 0.0
    %88 = vmatpush1.msra.mxu0 0.0
    %89 = vmatprep.subr.mxu0 0.0
    %90 = vmatpush1.msra.mxu0 0.0
    %91 = vmatprep.subr.mxu0 0.0
    %92 = vmatpush1.msra.mxu0 0.0
    %93 = vmatprep.subr.mxu0 0.0
    %94 = vmatpush1.msra.mxu0 %v51
    %95 = vmatprep.subr.mxu0 0.0
    %96 = vmatpush2.msra.mxu0 0.0
    %97 = vmatprep.subr.mxu0 0.0
    %98 = vmatpush2.msra.mxu0 0.0
    %99 = vmatprep.subr.mxu0 0.0
    %100 = vmatpush2.msra.mxu0 0.0
    %101 = vmatprep.subr.mxu0 0.0
    %102 = vmatpush2.msra.mxu0 0.0
    %103 = vmatprep.subr.mxu0 0.0
    %104 = vmatpush2.msra.mxu0 0.0
    %105 = vmatprep.subr.mxu0 0.0
    %106 = vmatpush2.msra.mxu0 0.0
    %107 = vmatprep.subr.mxu0 0.0
    %108 = vmatpush2.msra.mxu0 0.0
    %109 = vmatprep.subr.mxu0 0.0
    %110 = vmatpush2.msra.mxu0 0.0
    %111 = vmatprep.subr.mxu0 0.0
    %112 = vmatpush2.msra.mxu0 0.0
    %113 = vmatprep.subr.mxu0 0.0
    %114 = vmatpush2.msra.mxu0 0.0
    %115 = vmatprep.subr.mxu0 0.0
    %116 = vmatpush2.msra.mxu0 0.0
    %117 = vmatprep.subr.mxu0 0.0
    %118 = vmatpush2.msra.mxu0 0.0
    %119 = vmatprep.subr.mxu0 0.0
    %120 = vmatpush2.msra.mxu0 0.0
    %121 = vmatprep.subr.mxu0 0.0
    %122 = vmatpush2.msra.mxu0 0.0
    %123 = vmatprep.subr.mxu0 0.0
    %124 = vmatpush2.msra.mxu0 0.0
    %125 = vmatprep.subr.mxu0 0.0
    %126 = vmatpush2.msra.mxu0 0.0
    %127 = vmatprep.mubr.f32.mxu0 0.0
    %128 = vmatmul.mubr.f32.gmra.mxu0 %v61
    %v129 = vpop.f32.mrf.mxu0
    %v130 = vadd.f32 %v57, %v129
    %v131 = vpop.f32.mrf.mxu0
    %132 = vdwg.mxu0
    %v133 = vmax.f32 %v130, 0.0
    %v134 = vld [vmem:[%s3] sm:$0xff]
    %v135 = vld [vmem:[%s3 + $0x8] sm:$0xff]
    %v136 = vld [vmem:[%s3 + $0x10] sm:$0xff]
    %v137 = vld [vmem:[%s3 + $0x18] sm:$0xff]
    %v138 = vld [vmem:[%s3 + $0x20] sm:$0xff]
    %v139 = vld [vmem:[%s3 + $0x28] sm:$0xff]
    %v140 = vld [vmem:[%s3 + $0x30] sm:$0xff]
    %v141 = vld [vmem:[%s3 + $0x38] sm:$0xff]
    %v142 = vld [vmem:[%s3 + $0x40] sm:$0xff]
    %v143 = vld [vmem:[%s3 + $0x48] sm:$0xff]
    %v144 = vld [vmem:[%s3 + $0x50] sm:$0xff]
    %v145 = vld [vmem:[%s3 + $0x58] sm:$0xff]
    %v146 = vld [vmem:[%s3 + $0x60] sm:$0xff]
    %v147 = vld [vmem:[%s3 + $0x68] sm:$0xff]
    %v148 = vld [vmem:[%s3 + $0x70] sm:$0xff]
    %v149 = vld [vmem:[%s3 + $0x78] sm:$0xff]
    %v150 = vld [vmem:[#allocation4] sm:$0x1]
    %v152 = vlaneseq
    %v153 = vshrl.u32 %v152, 7
    %v154 = vsub.s32 0, %v153
    %v155 = vrot.slane %v150, %v154
    %157 = vmatprep.subr.mxu0 0.0
    %158 = vmatpush1.msra.mxu0 %v149
    %159 = vmatprep.subr.mxu0 0.0
    %160 = vmatpush1.msra.mxu0 %v148
    %161 = vmatprep.subr.mxu0 0.0
    %162 = vmatpush1.msra.mxu0 %v147
    %163 = vmatprep.subr.mxu0 0.0
    %164 = vmatpush1.msra.mxu0 %v146
    %165 = vmatprep.subr.mxu0 0.0
    %166 = vmatpush1.msra.mxu0 %v145
    %167 = vmatprep.subr.mxu0 0.0
    %168 = vmatpush1.msra.mxu0 %v144
    %169 = vmatprep.subr.mxu0 0.0
    %170 = vmatpush1.msra.mxu0 %v143
    %171 = vmatprep.subr.mxu0 0.0
    %172 = vmatpush1.msra.mxu0 %v142
    %173 = vmatprep.subr.mxu0 0.0
    %174 = vmatpush1.msra.mxu0 %v141
    %175 = vmatprep.subr.mxu0 0.0
    %176 = vmatpush1.msra.mxu0 %v140
    %177 = vmatprep.subr.mxu0 0.0
    %178 = vmatpush1.msra.mxu0 %v139
    %179 = vmatprep.subr.mxu0 0.0
    %180 = vmatpush1.msra.mxu0 %v138
    %181 = vmatprep.subr.mxu0 0.0
    %182 = vmatpush1.msra.mxu0 %v137
    %183 = vmatprep.subr.mxu0 0.0
    %184 = vmatpush1.msra.mxu0 %v136
    %185 = vmatprep.subr.mxu0 0.0
    %186 = vmatpush1.msra.mxu0 %v135
    %187 = vmatprep.subr.mxu0 0.0
    %188 = vmatpush1.msra.mxu0 %v134
    %189 = vmatprep.subr.mxu0 0.0
    %190 = vmatpush2.msra.mxu0 0.0
    %191 = vmatprep.subr.mxu0 0.0
    %192 = vmatpush2.msra.mxu0 0.0
    %193 = vmatprep.subr.mxu0 0.0
    %194 = vmatpush2.msra.mxu0 0.0
    %195 = vmatprep.subr.mxu0 0.0
    %196 = vmatpush2.msra.mxu0 0.0
    %197 = vmatprep.subr.mxu0 0.0
    %198 = vmatpush2.msra.mxu0 0.0
    %199 = vmatprep.subr.mxu0 0.0
    %200 = vmatpush2.msra.mxu0 0.0
    %201 = vmatprep.subr.mxu0 0.0
    %202 = vmatpush2.msra.mxu0 0.0
    %203 = vmatprep.subr.mxu0 0.0
    %204 = vmatpush2.msra.mxu0 0.0
    %205 = vmatprep.subr.mxu0 0.0
    %206 = vmatpush2.msra.mxu0 0.0
    %207 = vmatprep.subr.mxu0 0.0
    %208 = vmatpush2.msra.mxu0 0.0
    %209 = vmatprep.subr.mxu0 0.0
    %210 = vmatpush2.msra.mxu0 0.0
    %211 = vmatprep.subr.mxu0 0.0
    %212 = vmatpush2.msra.mxu0 0.0
    %213 = vmatprep.subr.mxu0 0.0
    %214 = vmatpush2.msra.mxu0 0.0
    %215 = vmatprep.subr.mxu0 0.0
    %216 = vmatpush2.msra.mxu0 0.0
    %217 = vmatprep.subr.mxu0 0.0
    %218 = vmatpush2.msra.mxu0 0.0
    %219 = vmatprep.subr.mxu0 0.0
    %220 = vmatpush2.msra.mxu0 0.0
    %221 = vmatprep.mubr.f32.mxu0 0.0
    %222 = vmatmul.mubr.f32.gmra.mxu0 %v133
    %v223 = vpop.f32.mrf.mxu0
    %v224 = vadd.f32 %v155, %v223
    %v225 = vpop.f32.mrf.mxu0
    %226 = vdwg.mxu0
    %v227 = vmax.f32 %v224, 0.0
    %v228 = vld [vmem:[%s5] sm:$0xff]
    %v229 = vld [vmem:[%s5 + $0x8] sm:$0xff]
    %v230 = vld [vmem:[%s5 + $0x10] sm:$0xff]
    %v231 = vld [vmem:[%s5 + $0x18] sm:$0xff]
    %v232 = vld [vmem:[%s5 + $0x20] sm:$0xff]
    %v233 = vld [vmem:[%s5 + $0x28] sm:$0xff]
    %v234 = vld [vmem:[%s5 + $0x30] sm:$0xff]
    %v235 = vld [vmem:[%s5 + $0x38] sm:$0xff]
    %v236 = vld [vmem:[%s5 + $0x40] sm:$0xff]
    %v237 = vld [vmem:[%s5 + $0x48] sm:$0xff]
    %v238 = vld [vmem:[%s5 + $0x50] sm:$0xff]
    %v239 = vld [vmem:[%s5 + $0x58] sm:$0xff]
    %v240 = vld [vmem:[%s5 + $0x60] sm:$0xff]
    %v241 = vld [vmem:[%s5 + $0x68] sm:$0xff]
    %v242 = vld [vmem:[%s5 + $0x70] sm:$0xff]
    %v243 = vld [vmem:[%s5 + $0x78] sm:$0xff]
    %v244 = vld [vmem:[%s6] sm:$0x1]
    %v246 = vlaneseq
    %v247 = vshrl.u32 %v246, 7
    %v248 = vsub.s32 0, %v247
    %v249 = vrot.slane %v244, %v248
    %251 = vmatprep.subr.mxu0 0.0
    %252 = vmatpush1.msra.mxu0 %v243
    %253 = vmatprep.subr.mxu0 0.0
    %254 = vmatpush1.msra.mxu0 %v242
    %255 = vmatprep.subr.mxu0 0.0
    %256 = vmatpush1.msra.mxu0 %v241
    %257 = vmatprep.subr.mxu0 0.0
    %258 = vmatpush1.msra.mxu0 %v240
    %259 = vmatprep.subr.mxu0 0.0
    %260 = vmatpush1.msra.mxu0 %v239
    %261 = vmatprep.subr.mxu0 0.0
    %262 = vmatpush1.msra.mxu0 %v238
    %263 = vmatprep.subr.mxu0 0.0
    %264 = vmatpush1.msra.mxu0 %v237
    %265 = vmatprep.subr.mxu0 0.0
    %266 = vmatpush1.msra.mxu0 %v236
    %267 = vmatprep.subr.mxu0 0.0
    %268 = vmatpush1.msra.mxu0 %v235
    %269 = vmatprep.subr.mxu0 0.0
    %270 = vmatpush1.msra.mxu0 %v234
    %271 = vmatprep.subr.mxu0 0.0
    %272 = vmatpush1.msra.mxu0 %v233
    %273 = vmatprep.subr.mxu0 0.0
    %274 = vmatpush1.msra.mxu0 %v232
    %275 = vmatprep.subr.mxu0 0.0
    %276 = vmatpush1.msra.mxu0 %v231
    %277 = vmatprep.subr.mxu0 0.0
    %278 = vmatpush1.msra.mxu0 %v230
    %279 = vmatprep.subr.mxu0 0.0
    %280 = vmatpush1.msra.mxu0 %v229
    %281 = vmatprep.subr.mxu0 0.0
    %282 = vmatpush1.msra.mxu0 %v228
    %283 = vmatprep.subr.mxu0 0.0
    %284 = vmatpush2.msra.mxu0 0.0
    %285 = vmatprep.subr.mxu0 0.0
    %286 = vmatpush2.msra.mxu0 0.0
    %287 = vmatprep.subr.mxu0 0.0
    %288 = vmatpush2.msra.mxu0 0.0
    %289 = vmatprep.subr.mxu0 0.0
    %290 = vmatpush2.msra.mxu0 0.0
    %291 = vmatprep.subr.mxu0 0.0
    %292 = vmatpush2.msra.mxu0 0.0
    %293 = vmatprep.subr.mxu0 0.0
    %294 = vmatpush2.msra.mxu0 0.0
    %295 = vmatprep.subr.mxu0 0.0
    %296 = vmatpush2.msra.mxu0 0.0
    %297 = vmatprep.subr.mxu0 0.0
    %298 = vmatpush2.msra.mxu0 0.0
    %299 = vmatprep.subr.mxu0 0.0
    %300 = vmatpush2.msra.mxu0 0.0
    %301 = vmatprep.subr.mxu0 0.0
    %302 = vmatpush2.msra.mxu0 0.0
    %303 = vmatprep.subr.mxu0 0.0
    %304 = vmatpush2.msra.mxu0 0.0
    %305 = vmatprep.subr.mxu0 0.0
    %306 = vmatpush2.msra.mxu0 0.0
    %307 = vmatprep.subr.mxu0 0.0
    %308 = vmatpush2.msra.mxu0 0.0
    %309 = vmatprep.subr.mxu0 0.0
    %310 = vmatpush2.msra.mxu0 0.0
    %311 = vmatprep.subr.mxu0 0.0
    %312 = vmatpush2.msra.mxu0 0.0
    %313 = vmatprep.subr.mxu0 0.0
    %314 = vmatpush2.msra.mxu0 0.0
    %315 = vmatprep.mubr.f32.mxu0 0.0
    %316 = vmatmul.mubr.f32.gmra.mxu0 %v227
    %v317 = vpop.f32.mrf.mxu0
    %v318 = vadd.f32 %v249, %v317
    %v319 = vpop.f32.mrf.mxu0
    %320 = vdwg.mxu0
    %vm321 = vcmask 31744
    %322 = vst.msk [vmem:[%s7] sm:$0xff] %vm321, %v318
    // Predicated region
    $region38: #{tpu_custom_call.1} parent=1 // pred_check
      _
    $region39: #{tpu_custom_call.1} parent=1 // pred_check_branch
      %324 = sbr.rel (0) target = $region41
    $region40: #{tpu_custom_call.1} parent=1 // pred_region
      _
    $region41: #{tpu_custom_call.1} parent=1 // pred_fallthru
      _
    // Predicated region
    $region42: #{tpu_custom_call.1} parent=1 // pred_check
      _
    $region43: #{tpu_custom_call.1} parent=1 // pred_check_branch
      %326 = sbr.rel (0) target = $region45
    $region44: #{tpu_custom_call.1} parent=1 // pred_region
      _
    $region45: #{tpu_custom_call.1} parent=1 // pred_fallthru
      _
    %327 = vsyncpa [#allocation3], 1
    %328 = vsyncpa [#allocation5], 1

</llo_original>
